<compile_context>
chip_gen: v6e
topology: v6e:2x2x1
jax: 0.10.0
libtpu: 0.0.40
codegen_flags: <defaults>
</compile_context>

<pallas_src>
import math

import jax
import jax.numpy as jnp
from jax import lax
from jax.experimental import pallas as pl
from jax.experimental.pallas import tpu as pltpu


# ---------------------------------------------------------------------------
# Kernel 1: hoisted input projection  gi = x @ [Wih_fwd | Wih_bwd] + b_ih
# One large MXU matmul per layer instead of T tiny per-step matmuls.
# ---------------------------------------------------------------------------
def _input_proj_kernel(x_ref, w_ref, b_ref, o_ref):
    o_ref[...] = (
        jnp.dot(x_ref[...], w_ref[...], preferred_element_type=jnp.float32)
        + b_ref[...]
    )


def input_proj_pallas(x2, w, b):
    """x2: (T*B, in_dim), w: (in_dim, D*3H), b: (1, D*3H) -> (T*B, D*3H)."""
    M = x2.shape[0]
    N = w.shape[1]
    return pl.pallas_call(
        _input_proj_kernel,
        out_shape=jax.ShapeDtypeStruct((M, N), jnp.float32),
    )(x2, w, b)


# ---------------------------------------------------------------------------
# Kernel 2: fused (bi)directional GRU recurrence over the whole sequence.
# Only h @ W_hh + gates remain inside the time loop; gi is precomputed.
# Variant A (intermediate layer): emits the per-timestep (T, B, D*H) sequence
#   (fwd/bwd concat folded into the output), in original time order.
# Variant B (last layer): emits only logits = cat(h_fwd_T, h_bwd_0) @ W_out + b.
# ---------------------------------------------------------------------------
def _make_gru_seq_kernel(T, B, H, num_dirs):
    G = 3 * H

    def kernel(gi_ref, whh_ref, bhh_ref, seq_ref, *scr):
        h_scrs = scr[:num_dirs]      # each (B, H)    recurrent state
        out_scrs = scr[num_dirs:]    # each (T, B, H) per-direction outputs

        for d in range(num_dirs):
            h_scrs[d][...] = jnp.zeros_like(h_scrs[d])

        # Weights are loaded into vregs once, resident for the whole loop.
        whh = [whh_ref[d] for d in range(num_dirs)]   # (H, G) each
        bhh = [bhh_ref[d] for d in range(num_dirs)]   # (1, G) each

        def step(s, carry):
            for d in range(num_dirs):
                t = s if d == 0 else T - 1 - s          # bwd walks time reversed
                gi = gi_ref[t][:, d * G:(d + 1) * G]    # (B, G) precomputed
                h = h_scrs[d][...]
                gh = jnp.dot(h, whh[d], preferred_element_type=jnp.float32) + bhh[d]
                # PyTorch GRU gate order: r, z, n
                r = jax.nn.sigmoid(gi[:, 0:H] + gh[:, 0:H])
                z = jax.nn.sigmoid(gi[:, H:2 * H] + gh[:, H:2 * H])
                n = jnp.tanh(gi[:, 2 * H:] + r * gh[:, 2 * H:])
                h_new = (1.0 - z) * n + z * h
                h_scrs[d][...] = h_new
                out_scrs[d][t] = h_new                  # original time order
            return carry

        lax.fori_loop(0, T, step, 0, unroll=True)

        # Fold the fwd/bwd feature concat into one full-width store.
        seq_ref[...] = jnp.concatenate(
            [out_scrs[d][...] for d in range(num_dirs)], axis=-1)

    return kernel


def gru_seq_layer_pallas(gi3, whh, bhh, *, T, B, H, num_dirs):
    kernel = _make_gru_seq_kernel(T, B, H, num_dirs)
    scratch = ([pltpu.VMEM((B, H), jnp.float32) for _ in range(num_dirs)]
               + [pltpu.VMEM((T, B, H), jnp.float32) for _ in range(num_dirs)])
    return pl.pallas_call(
        kernel,
        out_shape=jax.ShapeDtypeStruct((T, B, num_dirs * H), jnp.float32),
        scratch_shapes=scratch,
    )(gi3, whh, bhh)


def _make_gru_final_kernel(T, B, H, num_dirs):
    G = 3 * H

    def kernel(gi_ref, whh_ref, bhh_ref, ow_ref, ob_ref, logits_ref, *h_scrs):
        for d in range(num_dirs):
            h_scrs[d][...] = jnp.zeros_like(h_scrs[d])

        whh = [whh_ref[d] for d in range(num_dirs)]
        bhh = [bhh_ref[d] for d in range(num_dirs)]

        def step(s, carry):
            for d in range(num_dirs):
                t = s if d == 0 else T - 1 - s
                gi = gi_ref[t][:, d * G:(d + 1) * G]
                h = h_scrs[d][...]
                gh = jnp.dot(h, whh[d], preferred_element_type=jnp.float32) + bhh[d]
                r = jax.nn.sigmoid(gi[:, 0:H] + gh[:, 0:H])
                z = jax.nn.sigmoid(gi[:, H:2 * H] + gh[:, H:2 * H])
                n = jnp.tanh(gi[:, 2 * H:] + r * gh[:, 2 * H:])
                h_scrs[d][...] = (1.0 - z) * n + z * h
            return carry

        lax.fori_loop(0, T, step, 0, unroll=True)

        # hidden = cat(fwd_final, bwd_final)  (== cat(hidden[-2], hidden[-1]))
        hidden = jnp.concatenate([h_scrs[d][...] for d in range(num_dirs)], axis=-1)
        # Dropout on `hidden` is identity at inference; fused classifier Linear.
        logits_ref[...] = (
            jnp.dot(hidden, ow_ref[...], preferred_element_type=jnp.float32)
            + ob_ref[...]
        )

    return kernel


def gru_final_layer_pallas(gi3, whh, bhh, out_w, out_b, *, T, B, H, num_dirs):
    kernel = _make_gru_final_kernel(T, B, H, num_dirs)
    out_dim = out_w.shape[1]
    scratch = [pltpu.VMEM((B, H), jnp.float32) for _ in range(num_dirs)]
    return pl.pallas_call(
        kernel,
        out_shape=jax.ShapeDtypeStruct((B, out_dim), jnp.float32),
        scratch_shapes=scratch,
    )(gi3, whh, bhh, out_w, out_b)


# ---------------------------------------------------------------------------
# Model forward
# ---------------------------------------------------------------------------
def bert_gru_sentiment_forward(params, text, *, hidden_dim, n_layers, bidirectional):
    # TODO(synk): the full pretrained 12-layer BERT encoder has no in-script
    # equivalent; `bert(text)[0]` is replaced by a deterministic token-embedding
    # lookup with the same (B, T, E) output shape.
    embedded = params["embedding"][text]                 # (B, T, E)
    Bsz, T, _E = embedded.shape
    H = hidden_dim
    num_dirs = 2 if bidirectional else 1

    # time-major, (time, batch) flattened for the big projection matmul
    x2 = jnp.transpose(embedded, (1, 0, 2)).reshape(T * Bsz, -1)

    logits = None
    for layer in range(n_layers):
        p = params["gru"][layer]
        gi = input_proj_pallas(x2, p["wih"], p["bih"])          # (T*B, D*3H)
        gi3 = gi.reshape(T, Bsz, num_dirs * 3 * H)
        if layer == n_layers - 1:
            # Only the final hidden states feed the classifier -> fused kernel.
            logits = gru_final_layer_pallas(
                gi3, p["whh"], p["bhh"], params["out_w"], params["out_b"],
                T=T, B=Bsz, H=H, num_dirs=num_dirs)
        else:
            seq = gru_seq_layer_pallas(
                gi3, p["whh"], p["bhh"], T=T, B=Bsz, H=H, num_dirs=num_dirs)
            x2 = seq.reshape(T * Bsz, num_dirs * H)
    return logits


# ---------------------------------------------------------------------------
# Pure-JAX reference (same parameter layout) for validation
# ---------------------------------------------------------------------------
def ref_forward(params, text, *, hidden_dim, n_layers, bidirectional):
    embedded = params["embedding"][text]                 # (B, T, E)
    Bsz, T, _E = embedded.shape
    H = hidden_dim
    num_dirs = 2 if bidirectional else 1
    x = jnp.transpose(embedded, (1, 0, 2))               # (T, B, in)

    finals = None
    for layer in range(n_layers):
        p = params["gru"][layer]
        outs, fin = [], []
        for d in range(num_dirs):
            wih = p["wih"][:, d * 3 * H:(d + 1) * 3 * H]
            bih = p["bih"][:, d * 3 * H:(d + 1) * 3 * H]
            whh = p["whh"][d]
            bhh = p["bhh"][d]
            xs = x if d == 0 else jnp.flip(x, axis=0)

            def step(h, xt, wih=wih, bih=bih, whh=whh, bhh=bhh):
                gi = xt @ wih + bih
                gh = h @ whh + bhh
                r = jax.nn.sigmoid(gi[:, 0:H] + gh[:, 0:H])
                z = jax.nn.sigmoid(gi[:, H:2 * H] + gh[:, H:2 * H])
                n = jnp.tanh(gi[:, 2 * H:] + r * gh[:, 2 * H:])
                hn = (1.0 - z) * n + z * h
                return hn, hn

            h0 = jnp.zeros((Bsz, H), jnp.float32)
            hT, ys = lax.scan(step, h0, xs)
            if d == 1:
                ys = jnp.flip(ys, axis=0)
            outs.append(ys)
            fin.append(hT)
        x = jnp.concatenate(outs, axis=-1)
        finals = fin
    hidden = jnp.concatenate(finals, axis=-1)
    return hidden @ params["out_w"] + params["out_b"]


# ---------------------------------------------------------------------------
# Deterministic param init (PyTorch-GRU-style layout, directions concatenated
# along the gate axis for W_ih / b_ih and stacked for W_hh / b_hh)
# ---------------------------------------------------------------------------
def init_params(key, *, vocab_size, embedding_dim, hidden_dim, output_dim,
                n_layers, bidirectional):
    num_dirs = 2 if bidirectional else 1
    keys = iter(jax.random.split(key, 64))
    params = {"embedding": jax.random.normal(
        next(keys), (vocab_size, embedding_dim), jnp.float32) * 0.02}

    k = 1.0 / math.sqrt(hidden_dim)
    gru = []
    for layer in range(n_layers):
        in_dim = embedding_dim if layer == 0 else hidden_dim * num_dirs
        wih_p, whh_p, bih_p, bhh_p = [], [], [], []
        for _d in range(num_dirs):
            wih_p.append(jax.random.uniform(next(keys), (in_dim, 3 * hidden_dim),
                                            jnp.float32, -k, k))
            whh_p.append(jax.random.uniform(next(keys), (hidden_dim, 3 * hidden_dim),
                                            jnp.float32, -k, k))
            bih_p.append(jax.random.uniform(next(keys), (1, 3 * hidden_dim),
                                            jnp.float32, -k, k))
            bhh_p.append(jax.random.uniform(next(keys), (1, 3 * hidden_dim),
                                            jnp.float32, -k, k))
        gru.append({
            "wih": jnp.concatenate(wih_p, axis=1),    # (in_dim, D*3H)
            "bih": jnp.concatenate(bih_p, axis=1),    # (1, D*3H)
            "whh": jnp.stack(whh_p, axis=0),          # (D, H, 3H)
            "bhh": jnp.stack(bhh_p, axis=0),          # (D, 1, 3H)
        })
    params["gru"] = gru

    in_out = hidden_dim * num_dirs
    ko = 1.0 / math.sqrt(in_out)
    params["out_w"] = jax.random.uniform(next(keys), (in_out, output_dim),
                                         jnp.float32, -ko, ko)
    params["out_b"] = jax.random.uniform(next(keys), (1, output_dim),
                                         jnp.float32, -ko, ko)
    return params


# ---------------------------------------------------------------------------
if __name__ == "__main__":
    # Small shapes consistent with the module: batch=2, seq=8, embedding_dim=32,
    # hidden_dim=32, n_layers=2, bidirectional=True, output_dim=2.
    B, T = 2, 8
    VOCAB, E, H, OUT = 100, 32, 32, 2
    N_LAYERS, BIDIR = 2, True

    key = jax.random.PRNGKey(0)
    k_params, k_text = jax.random.split(key)
    params = init_params(k_params, vocab_size=VOCAB, embedding_dim=E,
                         hidden_dim=H, output_dim=OUT,
                         n_layers=N_LAYERS, bidirectional=BIDIR)
    text = jax.random.randint(k_text, (B, T), 0, VOCAB, dtype=jnp.int32)

    out = bert_gru_sentiment_forward(
        params, text, hidden_dim=H, n_layers=N_LAYERS, bidirectional=BIDIR)
    out = jax.block_until_ready(out)

    ref = ref_forward(
        params, text, hidden_dim=H, n_layers=N_LAYERS, bidirectional=BIDIR)
    ref = jax.block_until_ready(ref)

    assert out.shape == (B, OUT), out.shape
    assert jnp.allclose(out, ref, atol=2e-5, rtol=2e-5), (out, ref)
    print("KERNEL_OK")
</pallas_src>

<mosaic_0001>
module attributes {stable_mosaic.version = 11 : i64} {
  func.func @_input_proj_kernel(%arg0: memref<16x32xf32, #tpu.memory_space<vmem>>, %arg1: memref<32x192xf32, #tpu.memory_space<vmem>>, %arg2: memref<1x192xf32, #tpu.memory_space<vmem>>, %arg3: memref<16x192xf32, #tpu.memory_space<vmem>>) attributes {dimension_semantics = [], scalar_prefetch = 0 : i64, scratch_operands = 0 : i64, tpu.core_type = #tpu.core_type<tc>} {
    %c0 = arith.constant 0 : index
    %c0_0 = arith.constant 0 : index
    %0 = vector.load %arg0[%c0, %c0_0] : memref<16x32xf32, #tpu.memory_space<vmem>>, vector<16x32xf32>
    %c0_1 = arith.constant 0 : index
    %c0_2 = arith.constant 0 : index
    %1 = vector.load %arg1[%c0_1, %c0_2] : memref<32x192xf32, #tpu.memory_space<vmem>>, vector<32x192xf32>
    %cst = arith.constant dense<0.000000e+00> : vector<16x192xf32>
    %2 = tpu.matmul %0, %1, %cst {dimension_numbers = #tpu.dot_dimension_numbers<[1], [0], [0], [1], [0, 0, 1, 1], [], []>} : vector<16x32xf32>, vector<32x192xf32>, vector<16x192xf32> -> vector<16x192xf32>
    %c0_3 = arith.constant 0 : index
    %c0_4 = arith.constant 0 : index
    %3 = vector.load %arg2[%c0_3, %c0_4] : memref<1x192xf32, #tpu.memory_space<vmem>>, vector<1x192xf32>
    %4 = vector.broadcast %3 : vector<1x192xf32> to vector<16x192xf32>
    %5 = arith.addf %2, %4 : vector<16x192xf32>
    %c0_5 = arith.constant 0 : index
    %c0_6 = arith.constant 0 : index
    %6 = vector.load %arg3[%c0_5, %c0_6] : memref<16x192xf32, #tpu.memory_space<vmem>>, vector<16x192xf32>
    tpu.vector_store %arg3[%c0_5, %c0_6], %5 {strides = array<i32>} : memref<16x192xf32, #tpu.memory_space<vmem>>, vector<16x192xf32>,
    return
  }
}

</mosaic_0001>

<llo_original>
// kernel: tpu_custom_call.1
$region0: #{tpu_custom_call.1}
  #allocation0 [shape = 'u32[]', space=smem, size = 0x4, offset = 0x4, fixed_abs, tag = 'smem constant byte address 0x4 - core index']
  #allocation1 [shape = 'u32[144,128]{1,0:T(1,128)}', space=vmem, size = 0x12000, scoped, tag = 'internal scratch']
  %s0 = inlined_call_operand.hbm [shape: f32[16,32], index: 0, kind: input, shape index: {}]
  %s1 = inlined_call_operand.hbm [shape: f32[32,192], index: 1, kind: input, shape index: {}]
  %s2 = inlined_call_operand.vmem [shape: f32[1,192], index: 2, kind: input, shape index: {}]
  %s3 = inlined_call_operand.hbm [shape: f32[16,192], index: 3, kind: output, shape index: {}]
  %s4 = sld [smem:[#allocation0]]
  $region30: #{tpu_custom_call.1} parent=0
    _
  %s6 = ssub.s32 1, %s4
  %s7 = scalar_select 0, %s6, %s4
  $region1: #{tpu_custom_call.1} parent=0
    #allocation2 [shape = 'u8[8192]{0}', space=vmem, size = 0x2000, scoped, tag = 'input window, operand 0, single buffered']
    #allocation3 [shape = 's32[1]{0}', space=sflag, size = 0x4, scoped, tag = 'scoped memory for tpu_custom_call.1']
    #allocation4 [shape = 's32[1]{0}', space=sflag, size = 0x4, scoped, tag = 'scoped memory for tpu_custom_call.1']
    #allocation5 [shape = 'u8[32768]{0}', space=vmem, size = 0x8000, scoped, tag = 'input window, operand 1, single buffered']
    #allocation6 [shape = 's32[1]{0}', space=sflag, size = 0x4, scoped, tag = 'scoped memory for tpu_custom_call.1']
    #allocation7 [shape = 'u8[16384]{0}', space=vmem, size = 0x4000, scoped, tag = 'output window, operand 0, single buffered']
    %8 = vsyncpa [#allocation3], 0
    %9 = vsyncpa [#allocation6], 0
    %10 = vsyncpa [#allocation4], 0
    // Predicated region
    $region2: #{tpu_custom_call.1} parent=1 // pred_check
      _
    $region3: #{tpu_custom_call.1} parent=1 // pred_check_branch
      %12 = sbr.rel (0) target = $region5
    $region4: #{tpu_custom_call.1} parent=1 // pred_region
      %s14 = ssub.s32 256, 256
      %15 = vsyncadd [#allocation3], %s14
      %s16 = sshll.u32 [#allocation2], 4
      %s17 = int_to_ptr.vmem [resolvable:$true] %s16
      %22 = dma.hbm_to_vmem [thread:$0]  %s0, 256, %s17, [#allocation3], 128, 128, 8
    $region5: #{tpu_custom_call.1} parent=1 // pred_fallthru
      _
    // Predicated region
    $region6: #{tpu_custom_call.1} parent=1 // pred_check
      _
    $region7: #{tpu_custom_call.1} parent=1 // pred_check_branch
      %24 = sbr.rel (0) target = $region9
    $region8: #{tpu_custom_call.1} parent=1 // pred_region
      %s26 = ssub.s32 1024, 1024
      %27 = vsyncadd [#allocation6], %s26
      %s28 = sshll.u32 [#allocation5], 4
      %s29 = int_to_ptr.vmem [resolvable:$true] %s28
      %34 = dma.hbm_to_vmem [thread:$0]  %s1, 1024, %s29, [#allocation6], 256, 256, 16
    $region9: #{tpu_custom_call.1} parent=1 // pred_fallthru
      _
    // Predicated region
    $region10: #{tpu_custom_call.1} parent=1 // pred_check
      _
    $region11: #{tpu_custom_call.1} parent=1 // pred_check_branch
      %36 = sbr.rel (0) target = $region13
    $region12: #{tpu_custom_call.1} parent=1 // pred_region
      _
    $region13: #{tpu_custom_call.1} parent=1 // pred_fallthru
      _
    // Predicated region
    $region14: #{tpu_custom_call.1} parent=1 // pred_check
      _
    $region15: #{tpu_custom_call.1} parent=1 // pred_check_branch
      %38 = sbr.rel (0) target = $region17
    $region16: #{tpu_custom_call.1} parent=1 // pred_region
      %39 = dma.done [#allocation3], 256
    $region17: #{tpu_custom_call.1} parent=1 // pred_fallthru
      _
    // Predicated region
    $region18: #{tpu_custom_call.1} parent=1 // pred_check
      _
    $region19: #{tpu_custom_call.1} parent=1 // pred_check_branch
      %41 = sbr.rel (0) target = $region21
    $region20: #{tpu_custom_call.1} parent=1 // pred_region
      %42 = dma.done [#allocation6], 1024
    $region21: #{tpu_custom_call.1} parent=1 // pred_fallthru
      _
    %v43 = vld [vmem:[#allocation2] sm:$0xff]
    %v44 = vld [vmem:[#allocation2 + $0x8] sm:$0xff]
    %v45 = vld [vmem:[#allocation5] sm:$0xff]
    %v46 = vld [vmem:[#allocation5 + $0x8] sm:$0xff]
    %v47 = vld [vmem:[#allocation5 + $0x10] sm:$0xff]
    %v48 = vld [vmem:[#allocation5 + $0x18] sm:$0xff]
    %v49 = vld [vmem:[#allocation5 + $0x20] sm:$0xff]
    %v50 = vld [vmem:[#allocation5 + $0x28] sm:$0xff]
    %v51 = vld [vmem:[#allocation5 + $0x30] sm:$0xff]
    %v52 = vld [vmem:[#allocation5 + $0x38] sm:$0xff]
    %v53 = vld [vmem:[%s2] sm:$0x3]
    %v55 = vlaneseq
    %v56 = vshrl.u32 %v55, 7
    %v57 = vsub.s32 0, %v56
    %v58 = vrot.slane %v53, %v57
    %v59 = vlaneseq
    %v60 = vshrl.u32 %v59, 7
    %v61 = vsub.s32 1, %v60
    %v62 = vrot.slane %v53, %v61
    %vm65 = vcmask 261120
    %v67 = vsel %vm65, %v43, 0
    %v70 = vsel %vm65, %v44, 0
    %72 = vmatprep.subr.mxu0 0.0
    %73 = vmatpush1.msra.mxu0 0.0
    %74 = vmatprep.subr.mxu0 0.0
    %75 = vmatpush1.msra.mxu0 0.0
    %76 = vmatprep.subr.mxu0 0.0
    %77 = vmatpush1.msra.mxu0 0.0
    %78 = vmatprep.subr.mxu0 0.0
    %79 = vmatpush1.msra.mxu0 0.0
    %80 = vmatprep.subr.mxu0 0.0
    %81 = vmatpush1.msra.mxu0 0.0
    %82 = vmatprep.subr.mxu0 0.0
    %83 = vmatpush1.msra.mxu0 0.0
    %84 = vmatprep.subr.mxu0 0.0
    %85 = vmatpush1.msra.mxu0 0.0
    %86 = vmatprep.subr.mxu0 0.0
    %87 = vmatpush1.msra.mxu0 0.0
    %88 = vmatprep.subr.mxu0 0.0
    %89 = vmatpush1.msra.mxu0 0.0
    %90 = vmatprep.subr.mxu0 0.0
    %91 = vmatpush1.msra.mxu0 0.0
    %92 = vmatprep.subr.mxu0 0.0
    %93 = vmatpush1.msra.mxu0 0.0
    %94 = vmatprep.subr.mxu0 0.0
    %95 = vmatpush1.msra.mxu0 0.0
    %96 = vmatprep.subr.mxu0 %v52
    %97 = vmatpush1.msra.mxu0 %v51
    %98 = vmatprep.subr.mxu0 %v50
    %99 = vmatpush1.msra.mxu0 %v49
    %100 = vmatprep.subr.mxu0 %v48
    %101 = vmatpush1.msra.mxu0 %v47
    %102 = vmatprep.subr.mxu0 %v46
    %103 = vmatpush1.msra.mxu0 %v45
    %104 = vmatprep.subr.mxu0 0.0
    %105 = vmatpush2.msra.mxu0 0.0
    %106 = vmatprep.subr.mxu0 0.0
    %107 = vmatpush2.msra.mxu0 0.0
    %108 = vmatprep.subr.mxu0 0.0
    %109 = vmatpush2.msra.mxu0 0.0
    %110 = vmatprep.subr.mxu0 0.0
    %111 = vmatpush2.msra.mxu0 0.0
    %112 = vmatprep.subr.mxu0 0.0
    %113 = vmatpush2.msra.mxu0 0.0
    %114 = vmatprep.subr.mxu0 0.0
    %115 = vmatpush2.msra.mxu0 0.0
    %116 = vmatprep.subr.mxu0 0.0
    %117 = vmatpush2.msra.mxu0 0.0
    %118 = vmatprep.subr.mxu0 0.0
    %119 = vmatpush2.msra.mxu0 0.0
    %120 = vmatprep.subr.mxu0 0.0
    %121 = vmatpush2.msra.mxu0 0.0
    %122 = vmatprep.subr.mxu0 0.0
    %123 = vmatpush2.msra.mxu0 0.0
    %124 = vmatprep.subr.mxu0 0.0
    %125 = vmatpush2.msra.mxu0 0.0
    %126 = vmatprep.subr.mxu0 0.0
    %127 = vmatpush2.msra.mxu0 0.0
    %128 = vmatprep.subr.mxu0 0.0
    %129 = vmatpush2.msra.mxu0 0.0
    %130 = vmatprep.subr.mxu0 0.0
    %131 = vmatpush2.msra.mxu0 0.0
    %132 = vmatprep.subr.mxu0 0.0
    %133 = vmatpush2.msra.mxu0 0.0
    %134 = vmatprep.subr.mxu0 0.0
    %135 = vmatpush2.msra.mxu0 0.0
    %136 = vmatprep.mubr.f32.mxu0 0.0
    %137 = vmatmul.mubr.f32.gmra.mxu0 %v67
    %v138 = vpop.f32.mrf.mxu0
    %v139 = vadd.f32 %v58, %v138
    %v140 = vpop.f32.mrf.mxu0
    %v141 = vadd.f32 %v62, %v140
    %142 = vmatprep.mubr.f32.mxu0 0.0
    %143 = vmatmul.mubr.f32.gmra.mxu0 %v70
    %v144 = vpop.f32.mrf.mxu0
    %v145 = vadd.f32 %v58, %v144
    %v146 = vpop.f32.mrf.mxu0
    %v147 = vadd.f32 %v62, %v146
    %148 = vdwg.mxu0
    %149 = vst [vmem:[#allocation7] sm:$0xff] %v139
    %vm150 = vcmask 523264
    %151 = vst.msk [vmem:[#allocation7 + $0x8] sm:$0xff] %vm150, %v141
    %152 = vst [vmem:[#allocation7 + $0x10] sm:$0xff] %v145
    %153 = vst.msk [vmem:[#allocation7 + $0x18] sm:$0xff] %vm150, %v147
    // Predicated region
    $region22: #{tpu_custom_call.1} parent=1 // pred_check
      _
    $region23: #{tpu_custom_call.1} parent=1 // pred_check_branch
      %155 = sbr.rel (0) target = $region25
    $region24: #{tpu_custom_call.1} parent=1 // pred_region
      %s157 = ssub.s32 512, 512
      %158 = vsyncadd [#allocation4], %s157
      %s159 = sshll.u32 [#allocation7], 4
      %s160 = int_to_ptr.vmem [resolvable:$true] %s159
      %165 = dma.vmem_to_hbm [thread:$0]  %s160, 512, %s3, [#allocation4], 256, 256, 16
    $region25: #{tpu_custom_call.1} parent=1 // pred_fallthru
      _
    // Predicated region
    $region26: #{tpu_custom_call.1} parent=1 // pred_check
      _
    $region27: #{tpu_custom_call.1} parent=1 // pred_check_branch
      %167 = sbr.rel (0) target = $region29
    $region28: #{tpu_custom_call.1} parent=1 // pred_region
      %168 = dma.done [#allocation4], 512
    $region29: #{tpu_custom_call.1} parent=1 // pred_fallthru
      _
    %169 = vsyncpa [#allocation3], 1
    %170 = vsyncpa [#allocation6], 1
    %171 = vsyncpa [#allocation4], 1

</llo_original>
